<compile_context>
chip_gen: v7x
topology: tpu7x:2x2x1
jax: 0.10.0
libtpu: 0.0.40
codegen_flags: <defaults>
</compile_context>

<pallas_src>
import inspect
import math

import jax
import jax.numpy as jnp
from jax.experimental import pallas as pl
from jax.experimental.pallas import tpu as pltpu


def _round_up(x, m):
    return ((x + m - 1) // m) * m


try:
    _HAS_BUFFERED = (hasattr(pl, "Buffered") and
                     "pipeline_mode" in inspect.signature(pl.BlockSpec).parameters)
except Exception:  # pragma: no cover
    _HAS_BUFFERED = False


# ----------------------------------------------------------------------------
# Fused kernel: block-diag embedding matmul -> block-diag classifier matmul ->
# per-head segmented softmax over the lane axis (single exp pass).
# ----------------------------------------------------------------------------
def _make_fused_kernel(head_slices, cast_to_bf16):
    NEG_BIG = -1e30  # plain Python float: exp(x - NEG_BIG) underflows to 0

    def kernel(x_ref, we_ref, be_ref, wc_ref, bc_ref, o_ref):
        x = x_ref[...]
        if cast_to_bf16:
            x = x.astype(jnp.bfloat16)          # weights are pre-cast host-side

        # All modality embeddings in one MXU pass: (rows, M*F).
        emb = jnp.dot(x, we_ref[...], preferred_element_type=jnp.float32) + be_ref[...]
        if cast_to_bf16:
            emb = emb.astype(jnp.bfloat16)

        # All classifier heads in one MXU pass, already in PyTorch's flattened
        # (rows, M*C_0 | M*C_1 | ... | pad) lane layout.
        logits = (jnp.dot(emb, wc_ref[...], preferred_element_type=jnp.float32)
                  + bc_ref[...])

        # Segmented softmax along the lane axis.  Per-head maxima are
        # scattered into one per-lane max vector so a SINGLE full-width exp
        # serves every head (EUP work does not scale with head count).
        lane = jax.lax.broadcasted_iota(jnp.int32, logits.shape, 1)
        masks = [(lane >= off) & (lane < off + width)
                 for off, width in head_slices]      # static unroll, few heads

        maxvec = jnp.zeros_like(logits)
        for mask in masks:
            m = jnp.max(jnp.where(mask, logits, NEG_BIG), axis=-1, keepdims=True)
            maxvec = jnp.where(mask, m, maxvec)

        e = jnp.exp(logits - maxvec)                 # one EUP pass, full width

        inv = jnp.zeros_like(logits)                 # per-lane 1/denominator
        for mask in masks:
            s = jnp.sum(jnp.where(mask, e, 0.0), axis=-1, keepdims=True)
            inv = jnp.where(mask, 1.0 / s, inv)      # exact: each row sums to 1

        o_ref[...] = (e * inv).astype(o_ref.dtype)   # padded lanes -> 0

    return kernel


def linear_fusion_forward_pallas(x_cat, w_emb_bd, b_emb, w_cls_bd, b_cls,
                                 head_slices, cast_to_bf16=False):
    rows, d_pad = x_cat.shape
    mf = w_emb_bd.shape[1]
    out_pad = w_cls_bd.shape[1]

    # cdiv-based row tiling: pad rows to a sublane multiple, aim for >=2
    # programs whenever there is enough work (v7x 2-TC sharding) and
    # ~512-row blocks at scale.
    rows8 = _round_up(rows, 8)
    if rows8 <= 8:
        row_block = rows8
    else:
        n_blocks = max(2, pl.cdiv(rows8, 512))
        row_block = _round_up(pl.cdiv(rows8, n_blocks), 8)
    grid = (pl.cdiv(rows8, row_block),)
    rows_pad = grid[0] * row_block
    if rows_pad != rows:
        x_cat = jnp.pad(x_cat, ((0, rows_pad - rows), (0, 0)))

    kernel = _make_fused_kernel(tuple(head_slices), cast_to_bf16)

    x_itemsize = x_cat.dtype.itemsize
    x_bytes = rows_pad * d_pad * x_itemsize
    w_bytes = (w_emb_bd.size * w_emb_bd.dtype.itemsize
               + w_cls_bd.size * w_cls_bd.dtype.itemsize
               + (mf + out_pad) * 4)
    out_bytes = rows_pad * out_pad * 4
    cost = pl.CostEstimate(
        flops=2 * rows_pad * (d_pad * mf + mf * out_pad),
        transcendentals=rows_pad * out_pad,
        bytes_accessed=x_bytes + w_bytes + out_bytes)

    def run(single_buffer_weights):
        if single_buffer_weights:
            def wspec(shape):
                # Constant index_map -> a second buffer is pure VMEM waste.
                return pl.BlockSpec(shape, lambda i: (0, 0),
                                    pipeline_mode=pl.Buffered(1))
            weight_bufs = 1
        else:
            def wspec(shape):
                return pl.BlockSpec(shape, lambda i: (0, 0))
            weight_bufs = 2

        # VMEM budget: weights (x1 or x2) + double-buffered x/out blocks +
        # intermediates, 2x slack, floored at 16 MiB (v5e scoped default).
        vmem_needed = (weight_bufs * w_bytes
                       + 2 * row_block * d_pad * x_itemsize
                       + 2 * row_block * out_pad * 4
                       + row_block * (mf + 2 * out_pad) * 4)
        vmem_limit = int(min(100 * 1024 * 1024,
                             max(16 * 1024 * 1024, 2 * vmem_needed)))

        return pl.pallas_call(
            kernel,
            grid=grid,
            in_specs=[
                pl.BlockSpec((row_block, d_pad), lambda i: (i, 0)),
                wspec((d_pad, mf)),
                wspec((1, mf)),
                wspec((mf, out_pad)),
                wspec((1, out_pad)),
            ],
            out_specs=pl.BlockSpec((row_block, out_pad), lambda i: (i, 0)),
            out_shape=jax.ShapeDtypeStruct((rows_pad, out_pad), jnp.float32),
            compiler_params=pltpu.CompilerParams(
                dimension_semantics=("parallel",),
                vmem_limit_bytes=vmem_limit),
            cost_estimate=cost,
        )(x_cat, w_emb_bd, b_emb.reshape(1, mf), w_cls_bd,
          b_cls.reshape(1, out_pad))

    out = None
    last_err = None
    for single_buf in ([True, False] if _HAS_BUFFERED else [False]):
        try:
            out = run(single_buf)
            break
        except Exception as e:  # fall back if Buffered(1) is unsupported here
            last_err = e
    if out is None:
        raise last_err
    return out[:rows]


# ----------------------------------------------------------------------------
# Module (parameter containers + host-side fusion of weights)
# ----------------------------------------------------------------------------
class Config:
    clip_size = 4
    fusion_params = {"conv": {"f_dim": 64}}


def _init_linear(key, fan_in, fan_out):
    # Deterministic init mimicking nn.Linear default: U(-1/sqrt(fan_in), ...)
    kw, kb = jax.random.split(key)
    bound = 1.0 / math.sqrt(fan_in)
    # Stored as (in, out) so the kernel computes x @ W + b directly.
    w = jax.random.uniform(kw, (fan_in, fan_out), jnp.float32, -bound, bound)
    b = jax.random.uniform(kb, (fan_out,), jnp.float32, -bound, bound)
    return w, b


class LinearFusionPallas:
    def __init__(self, config, n_modality, modality_size_list, key,
                 use_bf16_mxu=False):
        self.config = config
        self.seq_size = config.clip_size
        self.n_modality = n_modality
        self.modality_size_list = modality_size_list
        self.f_emb_sz = config.fusion_params["conv"]["f_dim"]
        self.use_bf16_mxu = use_bf16_mxu
        self.to_f_emb = [
            _init_linear(jax.random.fold_in(key, idx),
                         modality_size_list[idx], self.f_emb_sz)
            for idx in range(n_modality)
        ]
        self.classifiers = []
        self._fused = None

    def set_classifiers(self, n_class_list, key):
        for ci, n_class in enumerate(n_class_list):
            self.classifiers.append(
                _init_linear(jax.random.fold_in(key, 1000 + ci),
                             self.f_emb_sz, n_class))
        self._fused = None

    def _build_fused_params(self):
        M, F = self.n_modality, self.f_emb_sz
        d_total = sum(self.modality_size_list)
        d_pad = _round_up(d_total, 128)          # K-aligned first matmul
        mf = M * F

        # Block-diagonal embedding weight: modality m maps its D_m slice of
        # the concatenated input to lanes [m*F, (m+1)*F) of the embedding.
        w_emb = jnp.zeros((d_pad, mf), jnp.float32)
        b_emb = jnp.zeros((mf,), jnp.float32)
        off = 0
        for m, (w, b) in enumerate(self.to_f_emb):
            d = self.modality_size_list[m]
            w_emb = w_emb.at[off:off + d, m * F:(m + 1) * F].set(w)
            b_emb = b_emb.at[m * F:(m + 1) * F].set(b)
            off += d

        # All classifier heads concatenated along the output dim; each head is
        # block-diagonal over modalities so its logits land in the flattened
        # (M*C) order PyTorch's view() produces.  Lanes padded to a 128
        # multiple for unmasked full-width stores.
        widths = [M * wc.shape[1] for (wc, _) in self.classifiers]
        total = sum(widths)
        out_pad = max(128, _round_up(total, 128))
        w_cls = jnp.zeros((mf, out_pad), jnp.float32)
        b_cls = jnp.zeros((out_pad,), jnp.float32)
        head_slices = []
        o = 0
        for (wc, bc) in self.classifiers:
            c = wc.shape[1]
            for m in range(M):
                w_cls = w_cls.at[m * F:(m + 1) * F,
                                 o + m * c:o + (m + 1) * c].set(wc)
                b_cls = b_cls.at[o + m * c:o + (m + 1) * c].set(bc)
            head_slices.append((o, M * c))
            o += M * c

        if self.use_bf16_mxu:
            # Pre-cast once host-side; biases stay f32 (added after the f32
            # MXU accumulation).
            w_emb = w_emb.astype(jnp.bfloat16)
            w_cls = w_cls.astype(jnp.bfloat16)

        self._fused = (w_emb, b_emb, w_cls, b_cls, tuple(head_slices),
                       d_total, d_pad)

    def __call__(self, features):
        if self._fused is None:
            self._build_fused_params()
        (w_emb, b_emb, w_cls, b_cls, head_slices, d_total, d_pad) = self._fused

        # TODO(synk): at large activation sizes, pass each modality tensor as
        # its own pallas_call input (per-modality dots into the emb lanes)
        # instead of this concat, removing one activation HBM round trip and
        # the zero-block FLOPs of the block-diagonal first matmul.
        x_cat = jnp.concatenate(
            [features[m].reshape(-1, self.modality_size_list[m])
             for m in range(self.n_modality)], axis=-1)
        if d_pad != d_total:
            x_cat = jnp.pad(x_cat, ((0, 0), (0, d_pad - d_total)))

        out_full = linear_fusion_forward_pallas(
            x_cat, w_emb, b_emb, w_cls, b_cls, head_slices,
            cast_to_bf16=self.use_bf16_mxu)

        outputs = [out_full[:, off:off + width] for (off, width) in head_slices]
        loss_fuse = 0
        return outputs, loss_fuse


# ----------------------------------------------------------------------------
# Pure-JAX reference (uses the ORIGINAL per-modality / per-head weights)
# ----------------------------------------------------------------------------
def reference_forward(module, features):
    embs = []
    for idx in range(module.n_modality):
        x = features[idx].reshape(-1, module.modality_size_list[idx])
        w, b = module.to_f_emb[idx]
        embs.append(x @ w + b)
    z = jnp.stack(embs, axis=1)  # (B, M, F)
    outs = []
    for (wc, bc) in module.classifiers:
        x = jnp.einsum("bmf,fc->bmc", z, wc) + bc
        x = x.reshape(z.shape[0], -1)
        outs.append(jax.nn.softmax(x, axis=-1))
    return outs


if __name__ == "__main__":
    key = jax.random.PRNGKey(0)

    config = Config()
    n_modality = 2
    modality_size_list = [32, 48]
    n_class_list = [8, 16]

    module = LinearFusionPallas(config, n_modality, modality_size_list,
                                jax.random.fold_in(key, 1))
    module.set_classifiers(n_class_list, jax.random.fold_in(key, 2))

    # features[idx]: (batch, clip_size, modality_size) -> viewed to (-1, D).
    batch = 2
    features = [
        jax.random.normal(jax.random.fold_in(key, 10 + i),
                          (batch, config.clip_size, modality_size_list[i]),
                          jnp.float32)
        for i in range(n_modality)
    ]

    outputs, loss_fuse = module(features)
    outputs = [jax.block_until_ready(o) for o in outputs]

    refs = reference_forward(module, features)
    for o, r, n_class in zip(outputs, refs, n_class_list):
        assert o.shape == (batch * config.clip_size, n_modality * n_class), o.shape
        assert jnp.allclose(o, r, atol=1e-4, rtol=1e-4), "mismatch vs reference"

    assert loss_fuse == 0
    print("KERNEL_OK")
</pallas_src>

<mosaic_0001>
module attributes {stable_mosaic.version = 11 : i64} {
  func.func @kernel(%arg0: i32, %arg1: memref<8x128xf32, #tpu.memory_space<vmem>>, %arg2: memref<128x128xf32, #tpu.memory_space<vmem>>, %arg3: memref<1x128xf32, #tpu.memory_space<vmem>>, %arg4: memref<128x128xf32, #tpu.memory_space<vmem>>, %arg5: memref<1x128xf32, #tpu.memory_space<vmem>>, %arg6: memref<8x128xf32, #tpu.memory_space<vmem>>) attributes {dimension_semantics = [#tpu.dimension_semantics<parallel>], iteration_bounds = array<i64: 1>, scalar_prefetch = 0 : i64, scratch_operands = 0 : i64, tpu.core_type = #tpu.core_type<tc>, window_params = [{transform_indices = @transform_0, window_bounds = array<i64: 8, 128>}, {pipeline_mode = #tpu.pipeline_mode<synchronous>, transform_indices = @transform_1, window_bounds = array<i64: 128, 128>}, {pipeline_mode = #tpu.pipeline_mode<synchronous>, transform_indices = @transform_2, window_bounds = array<i64: 1, 128>}, {pipeline_mode = #tpu.pipeline_mode<synchronous>, transform_indices = @transform_3, window_bounds = array<i64: 128, 128>}, {pipeline_mode = #tpu.pipeline_mode<synchronous>, transform_indices = @transform_4, window_bounds = array<i64: 1, 128>}, {transform_indices = @transform_5, window_bounds = array<i64: 8, 128>}]} {
    %c0 = arith.constant 0 : index
    %c0_0 = arith.constant 0 : index
    %0 = vector.load %arg1[%c0, %c0_0] : memref<8x128xf32, #tpu.memory_space<vmem>>, vector<8x128xf32>
    %c0_1 = arith.constant 0 : index
    %c0_2 = arith.constant 0 : index
    %1 = vector.load %arg2[%c0_1, %c0_2] : memref<128x128xf32, #tpu.memory_space<vmem>>, vector<128x128xf32>
    %cst = arith.constant dense<0.000000e+00> : vector<8x128xf32>
    %2 = tpu.matmul %0, %1, %cst {dimension_numbers = #tpu.dot_dimension_numbers<[1], [0], [0], [1], [0, 0, 1, 1], [], []>} : vector<8x128xf32>, vector<128x128xf32>, vector<8x128xf32> -> vector<8x128xf32>
    %c0_3 = arith.constant 0 : index
    %c0_4 = arith.constant 0 : index
    %3 = vector.load %arg3[%c0_3, %c0_4] : memref<1x128xf32, #tpu.memory_space<vmem>>, vector<1x128xf32>
    %4 = vector.broadcast %3 : vector<1x128xf32> to vector<8x128xf32>
    %5 = arith.addf %2, %4 : vector<8x128xf32>
    %c0_5 = arith.constant 0 : index
    %c0_6 = arith.constant 0 : index
    %6 = vector.load %arg4[%c0_5, %c0_6] : memref<128x128xf32, #tpu.memory_space<vmem>>, vector<128x128xf32>
    %cst_7 = arith.constant dense<0.000000e+00> : vector<8x128xf32>
    %7 = tpu.matmul %5, %6, %cst_7 {dimension_numbers = #tpu.dot_dimension_numbers<[1], [0], [0], [1], [0, 0, 1, 1], [], []>} : vector<8x128xf32>, vector<128x128xf32>, vector<8x128xf32> -> vector<8x128xf32>
    %c0_8 = arith.constant 0 : index
    %c0_9 = arith.constant 0 : index
    %8 = vector.load %arg5[%c0_8, %c0_9] : memref<1x128xf32, #tpu.memory_space<vmem>>, vector<1x128xf32>
    %9 = vector.broadcast %8 : vector<1x128xf32> to vector<8x128xf32>
    %10 = arith.addf %7, %9 : vector<8x128xf32>
    %11 = tpu.iota {dimensions = array<i32: 1>} : vector<8x128xi32>
    %c0_i32 = arith.constant 0 : i32
    %12 = vector.broadcast %c0_i32 : i32 to vector<8x128xi32>
    %13 = arith.cmpi sge, %11, %12 : vector<8x128xi32>
    %c16_i32 = arith.constant 16 : i32
    %14 = vector.broadcast %c16_i32 : i32 to vector<8x128xi32>
    %15 = arith.cmpi slt, %11, %14 : vector<8x128xi32>
    %16 = arith.andi %13, %15 : vector<8x128xi1>
    %c16_i32_10 = arith.constant 16 : i32
    %17 = vector.broadcast %c16_i32_10 : i32 to vector<8x128xi32>
    %18 = arith.cmpi sge, %11, %17 : vector<8x128xi32>
    %c48_i32 = arith.constant 48 : i32
    %19 = vector.broadcast %c48_i32 : i32 to vector<8x128xi32>
    %20 = arith.cmpi slt, %11, %19 : vector<8x128xi32>
    %21 = arith.andi %18, %20 : vector<8x128xi1>
    %cst_11 = arith.constant 0.000000e+00 : f32
    %22 = vector.broadcast %cst_11 : f32 to vector<8x128xf32>
    %cst_12 = arith.constant -1.000000e+30 : f32
    %23 = vector.broadcast %cst_12 : f32 to vector<8x128xf32>
    %24 = arith.select %16, %10, %23 : vector<8x128xi1>, vector<8x128xf32>
    %cst_13 = arith.constant dense<0xFF800000> : vector<8xf32>
    %25 = vector.multi_reduction <maximumf>, %24, %cst_13 [1] : vector<8x128xf32> to vector<8xf32>
    %26 = vector.shape_cast %25 : vector<8xf32> to vector<8x1xf32>
    %27 = vector.shape_cast %26 : vector<8x1xf32> to vector<8x1xf32>
    %28 = vector.broadcast %27 : vector<8x1xf32> to vector<8x128xf32>
    %29 = arith.select %16, %28, %22 : vector<8x128xi1>, vector<8x128xf32>
    %cst_14 = arith.constant -1.000000e+30 : f32
    %30 = vector.broadcast %cst_14 : f32 to vector<8x128xf32>
    %31 = arith.select %21, %10, %30 : vector<8x128xi1>, vector<8x128xf32>
    %cst_15 = arith.constant dense<0xFF800000> : vector<8xf32>
    %32 = vector.multi_reduction <maximumf>, %31, %cst_15 [1] : vector<8x128xf32> to vector<8xf32>
    %33 = vector.shape_cast %32 : vector<8xf32> to vector<8x1xf32>
    %34 = vector.shape_cast %33 : vector<8x1xf32> to vector<8x1xf32>
    %35 = vector.broadcast %34 : vector<8x1xf32> to vector<8x128xf32>
    %36 = arith.select %21, %35, %29 : vector<8x128xi1>, vector<8x128xf32>
    %37 = arith.subf %10, %36 : vector<8x128xf32>
    %38 = math.exp %37 : vector<8x128xf32>
    %cst_16 = arith.constant 0.000000e+00 : f32
    %39 = vector.broadcast %cst_16 : f32 to vector<8x128xf32>
    %cst_17 = arith.constant 0.000000e+00 : f32
    %40 = vector.broadcast %cst_17 : f32 to vector<8x128xf32>
    %41 = arith.select %16, %38, %40 : vector<8x128xi1>, vector<8x128xf32>
    %cst_18 = arith.constant dense<0.000000e+00> : vector<8xf32>
    %42 = vector.multi_reduction <add>, %41, %cst_18 [1] : vector<8x128xf32> to vector<8xf32>
    %43 = vector.shape_cast %42 : vector<8xf32> to vector<8x1xf32>
    %cst_19 = arith.constant 1.000000e+00 : f32
    %44 = vector.broadcast %cst_19 : f32 to vector<8x1xf32>
    %45 = arith.divf %44, %43 : vector<8x1xf32>
    %46 = vector.shape_cast %45 : vector<8x1xf32> to vector<8x1xf32>
    %47 = vector.broadcast %46 : vector<8x1xf32> to vector<8x128xf32>
    %48 = arith.select %16, %47, %39 : vector<8x128xi1>, vector<8x128xf32>
    %cst_20 = arith.constant 0.000000e+00 : f32
    %49 = vector.broadcast %cst_20 : f32 to vector<8x128xf32>
    %50 = arith.select %21, %38, %49 : vector<8x128xi1>, vector<8x128xf32>
    %cst_21 = arith.constant dense<0.000000e+00> : vector<8xf32>
    %51 = vector.multi_reduction <add>, %50, %cst_21 [1] : vector<8x128xf32> to vector<8xf32>
    %52 = vector.shape_cast %51 : vector<8xf32> to vector<8x1xf32>
    %cst_22 = arith.constant 1.000000e+00 : f32
    %53 = vector.broadcast %cst_22 : f32 to vector<8x1xf32>
    %54 = arith.divf %53, %52 : vector<8x1xf32>
    %55 = vector.shape_cast %54 : vector<8x1xf32> to vector<8x1xf32>
    %56 = vector.broadcast %55 : vector<8x1xf32> to vector<8x128xf32>
    %57 = arith.select %21, %56, %48 : vector<8x128xi1>, vector<8x128xf32>
    %58 = arith.mulf %38, %57 : vector<8x128xf32>
    %c0_23 = arith.constant 0 : index
    %c0_24 = arith.constant 0 : index
    %59 = vector.load %arg6[%c0_23, %c0_24] : memref<8x128xf32, #tpu.memory_space<vmem>>, vector<8x128xf32>
    tpu.vector_store %arg6[%c0_23, %c0_24], %58 {strides = array<i32>} : memref<8x128xf32, #tpu.memory_space<vmem>>, vector<8x128xf32>,
    return
  }
  func.func @transform_0(%arg0: i32) -> (i32, i32) {
    %c0_i32 = arith.constant 0 : i32
    %c0_i32_0 = arith.constant 0 : i32
    return %arg0, %c0_i32 : i32, i32
  }
  func.func @transform_1(%arg0: i32) -> (i32, i32) {
    %c0_i32 = arith.constant 0 : i32
    %c0_i32_0 = arith.constant 0 : i32
    %c0_i32_1 = arith.constant 0 : i32
    return %c0_i32, %c0_i32_0 : i32, i32
  }
  func.func @transform_2(%arg0: i32) -> (i32, i32) {
    %c0_i32 = arith.constant 0 : i32
    %c0_i32_0 = arith.constant 0 : i32
    %c0_i32_1 = arith.constant 0 : i32
    return %c0_i32, %c0_i32_0 : i32, i32
  }
  func.func @transform_3(%arg0: i32) -> (i32, i32) {
    %c0_i32 = arith.constant 0 : i32
    %c0_i32_0 = arith.constant 0 : i32
    %c0_i32_1 = arith.constant 0 : i32
    return %c0_i32, %c0_i32_0 : i32, i32
  }
  func.func @transform_4(%arg0: i32) -> (i32, i32) {
    %c0_i32 = arith.constant 0 : i32
    %c0_i32_0 = arith.constant 0 : i32
    %c0_i32_1 = arith.constant 0 : i32
    return %c0_i32, %c0_i32_0 : i32, i32
  }
  func.func @transform_5(%arg0: i32) -> (i32, i32) {
    %c0_i32 = arith.constant 0 : i32
    %c0_i32_0 = arith.constant 0 : i32
    return %arg0, %c0_i32 : i32, i32
  }
}

module attributes {stable_mosaic.version = 11 : i64} {
  func.func @kernel(%arg0: i32, %arg1: memref<8x128xf32, #tpu.memory_space<vmem>>, %arg2: memref<128x128xf32, #tpu.memory_space<vmem>>, %arg3: memref<1x128xf32, #tpu.memory_space<vmem>>, %arg4: memref<128x128xf32, #tpu.memory_space<vmem>>, %arg5: memref<1x128xf32, #tpu.memory_space<vmem>>, %arg6: memref<8x128xf32, #tpu.memory_space<vmem>>) attributes {dimension_semantics = [#tpu.dimension_semantics<parallel>], iteration_bounds = array<i64: 1>, scalar_prefetch = 0 : i64, scratch_operands = 0 : i64, tpu.core_type = #tpu.core_type<tc>, window_params = [{transform_indices = @transform_0, window_bounds = array<i64: 8, 128>}, {pipeline_mode = #tpu.pipeline_mode<synchronous>, transform_indices = @transform_1, window_bounds = array<i64: 128, 128>}, {pipeline_mode = #tpu.pipeline_mode<synchronous>, transform_indices = @transform_2, window_bounds = array<i64: 1, 128>}, {pipeline_mode = #tpu.pipeline_mode<synchronous>, transform_indices = @transform_3, window_bounds = array<i64: 128, 128>}, {pipeline_mode = #tpu.pipeline_mode<synchronous>, transform_indices = @transform_4, window_bounds = array<i64: 1, 128>}, {transform_indices = @transform_5, window_bounds = array<i64: 8, 128>}]} {
    %c0 = arith.constant 0 : index
    %c0_0 = arith.constant 0 : index
    %0 = vector.load %arg1[%c0, %c0_0] : memref<8x128xf32, #tpu.memory_space<vmem>>, vector<8x128xf32>
    %c0_1 = arith.constant 0 : index
    %c0_2 = arith.constant 0 : index
    %1 = vector.load %arg2[%c0_1, %c0_2] : memref<128x128xf32, #tpu.memory_space<vmem>>, vector<128x128xf32>
    %cst = arith.constant dense<0.000000e+00> : vector<8x128xf32>
    %2 = tpu.matmul %0, %1, %cst {dimension_numbers = #tpu.dot_dimension_numbers<[1], [0], [0], [1], [0, 0, 1, 1], [], []>} : vector<8x128xf32>, vector<128x128xf32>, vector<8x128xf32> -> vector<8x128xf32>
    %c0_3 = arith.constant 0 : index
    %c0_4 = arith.constant 0 : index
    %3 = vector.load %arg3[%c0_3, %c0_4] : memref<1x128xf32, #tpu.memory_space<vmem>>, vector<1x128xf32>
    %4 = vector.broadcast %3 : vector<1x128xf32> to vector<8x128xf32>
    %5 = arith.addf %2, %4 : vector<8x128xf32>
    %c0_5 = arith.constant 0 : index
    %c0_6 = arith.constant 0 : index
    %6 = vector.load %arg4[%c0_5, %c0_6] : memref<128x128xf32, #tpu.memory_space<vmem>>, vector<128x128xf32>
    %cst_7 = arith.constant dense<0.000000e+00> : vector<8x128xf32>
    %7 = tpu.matmul %5, %6, %cst_7 {dimension_numbers = #tpu.dot_dimension_numbers<[1], [0], [0], [1], [0, 0, 1, 1], [], []>} : vector<8x128xf32>, vector<128x128xf32>, vector<8x128xf32> -> vector<8x128xf32>
    %c0_8 = arith.constant 0 : index
    %c0_9 = arith.constant 0 : index
    %8 = vector.load %arg5[%c0_8, %c0_9] : memref<1x128xf32, #tpu.memory_space<vmem>>, vector<1x128xf32>
    %9 = vector.broadcast %8 : vector<1x128xf32> to vector<8x128xf32>
    %10 = arith.addf %7, %9 : vector<8x128xf32>
    %11 = tpu.iota {dimensions = array<i32: 1>} : vector<8x128xi32>
    %c0_i32 = arith.constant 0 : i32
    %12 = vector.broadcast %c0_i32 : i32 to vector<8x128xi32>
    %13 = arith.cmpi sge, %11, %12 : vector<8x128xi32>
    %c16_i32 = arith.constant 16 : i32
    %14 = vector.broadcast %c16_i32 : i32 to vector<8x128xi32>
    %15 = arith.cmpi slt, %11, %14 : vector<8x128xi32>
    %16 = arith.andi %13, %15 : vector<8x128xi1>
    %c16_i32_10 = arith.constant 16 : i32
    %17 = vector.broadcast %c16_i32_10 : i32 to vector<8x128xi32>
    %18 = arith.cmpi sge, %11, %17 : vector<8x128xi32>
    %c48_i32 = arith.constant 48 : i32
    %19 = vector.broadcast %c48_i32 : i32 to vector<8x128xi32>
    %20 = arith.cmpi slt, %11, %19 : vector<8x128xi32>
    %21 = arith.andi %18, %20 : vector<8x128xi1>
    %cst_11 = arith.constant 0.000000e+00 : f32
    %22 = vector.broadcast %cst_11 : f32 to vector<8x128xf32>
    %cst_12 = arith.constant -1.000000e+30 : f32
    %23 = vector.broadcast %cst_12 : f32 to vector<8x128xf32>
    %24 = arith.select %16, %10, %23 : vector<8x128xi1>, vector<8x128xf32>
    %cst_13 = arith.constant dense<0xFF800000> : vector<8xf32>
    %25 = vector.multi_reduction <maximumf>, %24, %cst_13 [1] : vector<8x128xf32> to vector<8xf32>
    %26 = vector.shape_cast %25 : vector<8xf32> to vector<8x1xf32>
    %27 = vector.shape_cast %26 : vector<8x1xf32> to vector<8x1xf32>
    %28 = vector.broadcast %27 : vector<8x1xf32> to vector<8x128xf32>
    %29 = arith.select %16, %28, %22 : vector<8x128xi1>, vector<8x128xf32>
    %cst_14 = arith.constant -1.000000e+30 : f32
    %30 = vector.broadcast %cst_14 : f32 to vector<8x128xf32>
    %31 = arith.select %21, %10, %30 : vector<8x128xi1>, vector<8x128xf32>
    %cst_15 = arith.constant dense<0xFF800000> : vector<8xf32>
    %32 = vector.multi_reduction <maximumf>, %31, %cst_15 [1] : vector<8x128xf32> to vector<8xf32>
    %33 = vector.shape_cast %32 : vector<8xf32> to vector<8x1xf32>
    %34 = vector.shape_cast %33 : vector<8x1xf32> to vector<8x1xf32>
    %35 = vector.broadcast %34 : vector<8x1xf32> to vector<8x128xf32>
    %36 = arith.select %21, %35, %29 : vector<8x128xi1>, vector<8x128xf32>
    %37 = arith.subf %10, %36 : vector<8x128xf32>
    %38 = math.exp %37 : vector<8x128xf32>
    %cst_16 = arith.constant 0.000000e+00 : f32
    %39 = vector.broadcast %cst_16 : f32 to vector<8x128xf32>
    %cst_17 = arith.constant 0.000000e+00 : f32
    %40 = vector.broadcast %cst_17 : f32 to vector<8x128xf32>
    %41 = arith.select %16, %38, %40 : vector<8x128xi1>, vector<8x128xf32>
    %cst_18 = arith.constant dense<0.000000e+00> : vector<8xf32>
    %42 = vector.multi_reduction <add>, %41, %cst_18 [1] : vector<8x128xf32> to vector<8xf32>
    %43 = vector.shape_cast %42 : vector<8xf32> to vector<8x1xf32>
    %cst_19 = arith.constant 1.000000e+00 : f32
    %44 = vector.broadcast %cst_19 : f32 to vector<8x1xf32>
    %45 = arith.divf %44, %43 : vector<8x1xf32>
    %46 = vector.shape_cast %45 : vector<8x1xf32> to vector<8x1xf32>
    %47 = vector.broadcast %46 : vector<8x1xf32> to vector<8x128xf32>
    %48 = arith.select %16, %47, %39 : vector<8x128xi1>, vector<8x128xf32>
    %cst_20 = arith.constant 0.000000e+00 : f32
    %49 = vector.broadcast %cst_20 : f32 to vector<8x128xf32>
    %50 = arith.select %21, %38, %49 : vector<8x128xi1>, vector<8x128xf32>
    %cst_21 = arith.constant dense<0.000000e+00> : vector<8xf32>
    %51 = vector.multi_reduction <add>, %50, %cst_21 [1] : vector<8x128xf32> to vector<8xf32>
    %52 = vector.shape_cast %51 : vector<8xf32> to vector<8x1xf32>
    %cst_22 = arith.constant 1.000000e+00 : f32
    %53 = vector.broadcast %cst_22 : f32 to vector<8x1xf32>
    %54 = arith.divf %53, %52 : vector<8x1xf32>
    %55 = vector.shape_cast %54 : vector<8x1xf32> to vector<8x1xf32>
    %56 = vector.broadcast %55 : vector<8x1xf32> to vector<8x128xf32>
    %57 = arith.select %21, %56, %48 : vector<8x128xi1>, vector<8x128xf32>
    %58 = arith.mulf %38, %57 : vector<8x128xf32>
    %c0_23 = arith.constant 0 : index
    %c0_24 = arith.constant 0 : index
    %59 = vector.load %arg6[%c0_23, %c0_24] : memref<8x128xf32, #tpu.memory_space<vmem>>, vector<8x128xf32>
    tpu.vector_store %arg6[%c0_23, %c0_24], %58 {strides = array<i32>} : memref<8x128xf32, #tpu.memory_space<vmem>>, vector<8x128xf32>,
    return
  }
  func.func @transform_0(%arg0: i32) -> (i32, i32) {
    %c0_i32 = arith.constant 0 : i32
    %c0_i32_0 = arith.constant 0 : i32
    return %arg0, %c0_i32 : i32, i32
  }
  func.func @transform_1(%arg0: i32) -> (i32, i32) {
    %c0_i32 = arith.constant 0 : i32
    %c0_i32_0 = arith.constant 0 : i32
    %c0_i32_1 = arith.constant 0 : i32
    return %c0_i32, %c0_i32_0 : i32, i32
  }
  func.func @transform_2(%arg0: i32) -> (i32, i32) {
    %c0_i32 = arith.constant 0 : i32
    %c0_i32_0 = arith.constant 0 : i32
    %c0_i32_1 = arith.constant 0 : i32
    return %c0_i32, %c0_i32_0 : i32, i32
  }
  func.func @transform_3(%arg0: i32) -> (i32, i32) {
    %c0_i32 = arith.constant 0 : i32
    %c0_i32_0 = arith.constant 0 : i32
    %c0_i32_1 = arith.constant 0 : i32
    return %c0_i32, %c0_i32_0 : i32, i32
  }
  func.func @transform_4(%arg0: i32) -> (i32, i32) {
    %c0_i32 = arith.constant 0 : i32
    %c0_i32_0 = arith.constant 0 : i32
    %c0_i32_1 = arith.constant 0 : i32
    return %c0_i32, %c0_i32_0 : i32, i32
  }
  func.func @transform_5(%arg0: i32) -> (i32, i32) {
    %c0_i32 = arith.constant 0 : i32
    %c0_i32_0 = arith.constant 0 : i32
    return %arg0, %c0_i32 : i32, i32
  }
}

</mosaic_0001>

<llo_original>
// kernel: tpu_custom_call.1
$region0: #{tpu_custom_call.1}
  #allocation0 [shape = 'u32[]', space=smem, size = 0x4, offset = 0x4, fixed_abs, tag = 'smem constant byte address 0x4 - core index']
  #allocation1 [shape = 'u32[144,128]{1,0:T(1,128)}', space=vmem, size = 0x12000, scoped, tag = 'internal scratch']
  %s0 = inlined_call_operand.hbm [shape: f32[8,128], index: 0, kind: input, shape index: {}]
  %s1 = inlined_call_operand.hbm [shape: f32[128,128], index: 1, kind: input, shape index: {}]
  %s2 = inlined_call_operand.vmem [shape: f32[1,128], index: 2, kind: input, shape index: {}]
  %s3 = inlined_call_operand.hbm [shape: f32[128,128], index: 3, kind: input, shape index: {}]
  %s4 = inlined_call_operand.vmem [shape: f32[1,128], index: 4, kind: input, shape index: {}]
  %s5 = inlined_call_operand.hbm [shape: f32[8,128], index: 5, kind: output, shape index: {}]
  %s6 = sld [smem:[#allocation0]]
  $region42: #{tpu_custom_call.1} parent=0
    _
  %s8 = ssub.s32 1, %s6
  %s9 = scalar_select 0, %s8, %s6
  $region1: #{tpu_custom_call.1} parent=0
    #allocation2 [shape = 'u8[4096]{0}', space=vmem, size = 0x1000, scoped, tag = 'input window, operand 0, single buffered']
    #allocation3 [shape = 's32[1]{0}', space=sflag, size = 0x4, scoped, tag = 'scoped memory for tpu_custom_call.1']
    #allocation4 [shape = 's32[1]{0}', space=sflag, size = 0x4, scoped, tag = 'scoped memory for tpu_custom_call.1']
    #allocation5 [shape = 'u8[65536]{0}', space=vmem, size = 0x10000, scoped, tag = 'input window, operand 1, single buffered']
    #allocation6 [shape = 's32[1]{0}', space=sflag, size = 0x4, scoped, tag = 'scoped memory for tpu_custom_call.1']
    #allocation7 [shape = 'u8[65536]{0}', space=vmem, size = 0x10000, scoped, tag = 'input window, operand 3, single buffered']
    #allocation8 [shape = 'u8[4096]{0}', space=vmem, size = 0x1000, scoped, tag = 'output window, operand 0, single buffered']
    %10 = vsyncpa [#allocation3], 0
    %11 = vsyncpa [#allocation6], 0
    %12 = vsyncpa [#allocation4], 0
    // Predicated region
    $region2: #{tpu_custom_call.1} parent=1 // pred_check
      _
    $region3: #{tpu_custom_call.1} parent=1 // pred_check_branch
      %14 = sbr.rel (0) target = $region5
    $region4: #{tpu_custom_call.1} parent=1 // pred_region
      %s16 = ssub.s32 128, 128
      %17 = vsyncadd [#allocation3], %s16
      %s19 = sshll.u32 [#allocation2], 4
      %s20 = int_to_ptr.vmem [resolvable:$true] %s19
      %22 = dma.hbm_to_vmem [thread:$0]  %s0, 128, %s20, [#allocation3]
    $region5: #{tpu_custom_call.1} parent=1 // pred_fallthru
      _
    // Predicated region
    $region6: #{tpu_custom_call.1} parent=1 // pred_check
      _
    $region7: #{tpu_custom_call.1} parent=1 // pred_check_branch
      %24 = sbr.rel (0) target = $region9
    $region8: #{tpu_custom_call.1} parent=1 // pred_region
      %s26 = ssub.s32 2048, 2048
      %27 = vsyncadd [#allocation6], %s26
      %s28 = sshll.u32 [#allocation5], 4
      %s29 = int_to_ptr.vmem [resolvable:$true] %s28
      %34 = dma.hbm_to_vmem [thread:$0]  %s1, 2048, %s29, [#allocation6], 128, 128, 8
    $region9: #{tpu_custom_call.1} parent=1 // pred_fallthru
      _
    // Predicated region
    $region10: #{tpu_custom_call.1} parent=1 // pred_check
      _
    $region11: #{tpu_custom_call.1} parent=1 // pred_check_branch
      %36 = sbr.rel (0) target = $region13
    $region12: #{tpu_custom_call.1} parent=1 // pred_region
      _
    $region13: #{tpu_custom_call.1} parent=1 // pred_fallthru
      _
    // Predicated region
    $region14: #{tpu_custom_call.1} parent=1 // pred_check
      _
    $region15: #{tpu_custom_call.1} parent=1 // pred_check_branch
      %38 = sbr.rel (0) target = $region17
    $region16: #{tpu_custom_call.1} parent=1 // pred_region
      %s40 = ssub.s32 2048, 2048
      %41 = vsyncadd [#allocation6], %s40
      %s42 = sshll.u32 [#allocation7], 4
      %s43 = int_to_ptr.vmem [resolvable:$true] %s42
      %48 = dma.hbm_to_vmem [thread:$0]  %s3, 2048, %s43, [#allocation6], 128, 128, 8
    $region17: #{tpu_custom_call.1} parent=1 // pred_fallthru
      _
    // Predicated region
    $region18: #{tpu_custom_call.1} parent=1 // pred_check
      _
    $region19: #{tpu_custom_call.1} parent=1 // pred_check_branch
      %50 = sbr.rel (0) target = $region21
    $region20: #{tpu_custom_call.1} parent=1 // pred_region
      _
    $region21: #{tpu_custom_call.1} parent=1 // pred_fallthru
      _
    // Predicated region
    $region22: #{tpu_custom_call.1} parent=1 // pred_check
      _
    $region23: #{tpu_custom_call.1} parent=1 // pred_check_branch
      %52 = sbr.rel (0) target = $region25
    $region24: #{tpu_custom_call.1} parent=1 // pred_region
      %53 = dma.done [#allocation3], 128
    $region25: #{tpu_custom_call.1} parent=1 // pred_fallthru
      _
    // Predicated region
    $region26: #{tpu_custom_call.1} parent=1 // pred_check
      _
    $region27: #{tpu_custom_call.1} parent=1 // pred_check_branch
      %55 = sbr.rel (0) target = $region29
    $region28: #{tpu_custom_call.1} parent=1 // pred_region
      %56 = dma.done [#allocation6], 2048
    $region29: #{tpu_custom_call.1} parent=1 // pred_fallthru
      _
    // Predicated region
    $region30: #{tpu_custom_call.1} parent=1 // pred_check
      _
    $region31: #{tpu_custom_call.1} parent=1 // pred_check_branch
      %58 = sbr.rel (0) target = $region33
    $region32: #{tpu_custom_call.1} parent=1 // pred_region
      %59 = dma.done [#allocation6], 2048
    $region33: #{tpu_custom_call.1} parent=1 // pred_fallthru
      _
    %v60 = vld [vmem:[#allocation2] sm:$0xff]
    %v61 = vld [vmem:[#allocation5] sm:$0xff]
    %v62 = vld [vmem:[#allocation5 + $0x8] sm:$0xff]
    %v63 = vld [vmem:[#allocation5 + $0x10] sm:$0xff]
    %v64 = vld [vmem:[#allocation5 + $0x18] sm:$0xff]
    %v65 = vld [vmem:[#allocation5 + $0x20] sm:$0xff]
    %v66 = vld [vmem:[#allocation5 + $0x28] sm:$0xff]
    %v67 = vld [vmem:[#allocation5 + $0x30] sm:$0xff]
    %v68 = vld [vmem:[#allocation5 + $0x38] sm:$0xff]
    %v69 = vld [vmem:[#allocation5 + $0x40] sm:$0xff]
    %v70 = vld [vmem:[#allocation5 + $0x48] sm:$0xff]
    %v71 = vld [vmem:[#allocation5 + $0x50] sm:$0xff]
    %v72 = vld [vmem:[#allocation5 + $0x58] sm:$0xff]
    %v73 = vld [vmem:[#allocation5 + $0x60] sm:$0xff]
    %v74 = vld [vmem:[#allocation5 + $0x68] sm:$0xff]
    %v75 = vld [vmem:[#allocation5 + $0x70] sm:$0xff]
    %v76 = vld [vmem:[#allocation5 + $0x78] sm:$0xff]
    %v77 = vld [vmem:[%s2] sm:$0x1]
    %v79 = vlaneseq
    %v80 = vshrl.u32 %v79, 7
    %v81 = vsub.s32 0, %v80
    %v82 = vrot.slane %v77, %v81
    %84 = vmatprep.subr.mxu0 0.0
    %85 = vmatpush1.msra.mxu0 %v61
    %86 = vmatprep.subr.mxu0 0.0
    %87 = vmatpush1.msra.mxu0 %v62
    %88 = vmatprep.subr.mxu0 0.0
    %89 = vmatpush1.msra.mxu0 %v63
    %90 = vmatprep.subr.mxu0 0.0
    %91 = vmatpush1.msra.mxu0 %v64
    %92 = vmatprep.subr.mxu0 0.0
    %93 = vmatpush1.msra.mxu0 %v65
    %94 = vmatprep.subr.mxu0 0.0
    %95 = vmatpush1.msra.mxu0 %v66
    %96 = vmatprep.subr.mxu0 0.0
    %97 = vmatpush1.msra.mxu0 %v67
    %98 = vmatprep.subr.mxu0 0.0
    %99 = vmatpush1.msra.mxu0 %v68
    %100 = vmatprep.subr.mxu0 0.0
    %101 = vmatpush1.msra.mxu0 %v69
    %102 = vmatprep.subr.mxu0 0.0
    %103 = vmatpush1.msra.mxu0 %v70
    %104 = vmatprep.subr.mxu0 0.0
    %105 = vmatpush1.msra.mxu0 %v71
    %106 = vmatprep.subr.mxu0 0.0
    %107 = vmatpush1.msra.mxu0 %v72
    %108 = vmatprep.subr.mxu0 0.0
    %109 = vmatpush1.msra.mxu0 %v73
    %110 = vmatprep.subr.mxu0 0.0
    %111 = vmatpush1.msra.mxu0 %v74
    %112 = vmatprep.subr.mxu0 0.0
    %113 = vmatpush1.msra.mxu0 %v75
    %114 = vmatprep.subr.mxu0 0.0
    %115 = vmatpush1.msra.mxu0 %v76
    %116 = vmatprep.subr.mxu0 0.0
    %117 = vmatpush1.msra.mxu0 0.0
    %118 = vmatprep.subr.mxu0 0.0
    %119 = vmatpush1.msra.mxu0 0.0
    %120 = vmatprep.subr.mxu0 0.0
    %121 = vmatpush1.msra.mxu0 0.0
    %122 = vmatprep.subr.mxu0 0.0
    %123 = vmatpush1.msra.mxu0 0.0
    %124 = vmatprep.subr.mxu0 0.0
    %125 = vmatpush1.msra.mxu0 0.0
    %126 = vmatprep.subr.mxu0 0.0
    %127 = vmatpush1.msra.mxu0 0.0
    %128 = vmatprep.subr.mxu0 0.0
    %129 = vmatpush1.msra.mxu0 0.0
    %130 = vmatprep.subr.mxu0 0.0
    %131 = vmatpush1.msra.mxu0 0.0
    %132 = vmatprep.subr.mxu0 0.0
    %133 = vmatpush1.msra.mxu0 0.0
    %134 = vmatprep.subr.mxu0 0.0
    %135 = vmatpush1.msra.mxu0 0.0
    %136 = vmatprep.subr.mxu0 0.0
    %137 = vmatpush1.msra.mxu0 0.0
    %138 = vmatprep.subr.mxu0 0.0
    %139 = vmatpush1.msra.mxu0 0.0
    %140 = vmatprep.subr.mxu0 0.0
    %141 = vmatpush1.msra.mxu0 0.0
    %142 = vmatprep.subr.mxu0 0.0
    %143 = vmatpush1.msra.mxu0 0.0
    %144 = vmatprep.subr.mxu0 0.0
    %145 = vmatpush1.msra.mxu0 0.0
    %146 = vmatprep.subr.mxu0 0.0
    %147 = vmatpush1.msra.mxu0 0.0
    %148 = vmatprep.mubr.f32.mxu0 0.0
    %149 = vmatmul.mubr.f32.gmra.mrb[0].mxu0 %v60
    %v150 = vpop.f32.mrb[0].mxu0
    %v151 = vadd.f32 %v82, %v150
    %v152 = vpop.f32.mrb[0].mxu0
    %153 = vdwg.mxu0
    %v154 = vld [vmem:[#allocation7] sm:$0xff]
    %v155 = vld [vmem:[#allocation7 + $0x8] sm:$0xff]
    %v156 = vld [vmem:[#allocation7 + $0x10] sm:$0xff]
    %v157 = vld [vmem:[#allocation7 + $0x18] sm:$0xff]
    %v158 = vld [vmem:[#allocation7 + $0x20] sm:$0xff]
    %v159 = vld [vmem:[#allocation7 + $0x28] sm:$0xff]
    %v160 = vld [vmem:[#allocation7 + $0x30] sm:$0xff]
    %v161 = vld [vmem:[#allocation7 + $0x38] sm:$0xff]
    %v162 = vld [vmem:[#allocation7 + $0x40] sm:$0xff]
    %v163 = vld [vmem:[#allocation7 + $0x48] sm:$0xff]
    %v164 = vld [vmem:[#allocation7 + $0x50] sm:$0xff]
    %v165 = vld [vmem:[#allocation7 + $0x58] sm:$0xff]
    %v166 = vld [vmem:[#allocation7 + $0x60] sm:$0xff]
    %v167 = vld [vmem:[#allocation7 + $0x68] sm:$0xff]
    %v168 = vld [vmem:[#allocation7 + $0x70] sm:$0xff]
    %v169 = vld [vmem:[#allocation7 + $0x78] sm:$0xff]
    %v170 = vld [vmem:[%s4] sm:$0x1]
    %v172 = vlaneseq
    %v173 = vshrl.u32 %v172, 7
    %v174 = vsub.s32 0, %v173
    %v175 = vrot.slane %v170, %v174
    %177 = vmatprep.subr.mxu0 0.0
    %178 = vmatpush1.msra.mxu0 %v154
    %179 = vmatprep.subr.mxu0 0.0
    %180 = vmatpush1.msra.mxu0 %v155
    %181 = vmatprep.subr.mxu0 0.0
    %182 = vmatpush1.msra.mxu0 %v156
    %183 = vmatprep.subr.mxu0 0.0
    %184 = vmatpush1.msra.mxu0 %v157
    %185 = vmatprep.subr.mxu0 0.0
    %186 = vmatpush1.msra.mxu0 %v158
    %187 = vmatprep.subr.mxu0 0.0
    %188 = vmatpush1.msra.mxu0 %v159
    %189 = vmatprep.subr.mxu0 0.0
    %190 = vmatpush1.msra.mxu0 %v160
    %191 = vmatprep.subr.mxu0 0.0
    %192 = vmatpush1.msra.mxu0 %v161
    %193 = vmatprep.subr.mxu0 0.0
    %194 = vmatpush1.msra.mxu0 %v162
    %195 = vmatprep.subr.mxu0 0.0
    %196 = vmatpush1.msra.mxu0 %v163
    %197 = vmatprep.subr.mxu0 0.0
    %198 = vmatpush1.msra.mxu0 %v164
    %199 = vmatprep.subr.mxu0 0.0
    %200 = vmatpush1.msra.mxu0 %v165
    %201 = vmatprep.subr.mxu0 0.0
    %202 = vmatpush1.msra.mxu0 %v166
    %203 = vmatprep.subr.mxu0 0.0
    %204 = vmatpush1.msra.mxu0 %v167
    %205 = vmatprep.subr.mxu0 0.0
    %206 = vmatpush1.msra.mxu0 %v168
    %207 = vmatprep.subr.mxu0 0.0
    %208 = vmatpush1.msra.mxu0 %v169
    %209 = vmatprep.subr.mxu0 0.0
    %210 = vmatpush1.msra.mxu0 0.0
    %211 = vmatprep.subr.mxu0 0.0
    %212 = vmatpush1.msra.mxu0 0.0
    %213 = vmatprep.subr.mxu0 0.0
    %214 = vmatpush1.msra.mxu0 0.0
    %215 = vmatprep.subr.mxu0 0.0
    %216 = vmatpush1.msra.mxu0 0.0
    %217 = vmatprep.subr.mxu0 0.0
    %218 = vmatpush1.msra.mxu0 0.0
    %219 = vmatprep.subr.mxu0 0.0
    %220 = vmatpush1.msra.mxu0 0.0
    %221 = vmatprep.subr.mxu0 0.0
    %222 = vmatpush1.msra.mxu0 0.0
    %223 = vmatprep.subr.mxu0 0.0
    %224 = vmatpush1.msra.mxu0 0.0
    %225 = vmatprep.subr.mxu0 0.0
    %226 = vmatpush1.msra.mxu0 0.0
    %227 = vmatprep.subr.mxu0 0.0
    %228 = vmatpush1.msra.mxu0 0.0
    %229 = vmatprep.subr.mxu0 0.0
    %230 = vmatpush1.msra.mxu0 0.0
    %231 = vmatprep.subr.mxu0 0.0
    %232 = vmatpush1.msra.mxu0 0.0
    %233 = vmatprep.subr.mxu0 0.0
    %234 = vmatpush1.msra.mxu0 0.0
    %235 = vmatprep.subr.mxu0 0.0
    %236 = vmatpush1.msra.mxu0 0.0
    %237 = vmatprep.subr.mxu0 0.0
    %238 = vmatpush1.msra.mxu0 0.0
    %239 = vmatprep.subr.mxu0 0.0
    %240 = vmatpush1.msra.mxu0 0.0
    %241 = vmatprep.mubr.f32.mxu0 0.0
    %242 = vmatmul.mubr.f32.gmra.mrb[0].mxu0 %v151
    %v243 = vpop.f32.mrb[0].mxu0
    %v244 = vadd.f32 %v175, %v243
    %v245 = vpop.f32.mrb[0].mxu0
    %246 = vdwg.mxu0
    %v247 = vlaneseq
    %v248 = vand.u32 %v247, 127
    %vm249 = vcmp.ge.s32.totalorder %v248, 0
    %vm250 = vcmp.lt.s32.totalorder %v248, 16
    %vm251 = vmand %vm249, %vm250
    %vm252 = vcmp.ge.s32.totalorder %v248, 16
    %vm253 = vcmp.lt.s32.totalorder %v248, 48
    %vm254 = vmand %vm252, %vm253
    %v255 = vsel %vm251, %v244, -1e+30
    %256 = vmax.xlane.f32.xlu0 %v255
    %v257 = vpop.xlane.xlu0 %256
    %v258 = vsel %vm251, %v257, 0.0
    %v259 = vsel %vm254, %v244, -1e+30
    %260 = vmax.xlane.f32.xlu0 %v259
    %v261 = vpop.xlane.xlu0 %260
    %v262 = vsel %vm254, %v261, %v258
    %v263 = vsub.f32 %v244, %v262
    %v264 = vmul.f32 %v263, 1.442695
    %v265 = vpow.pop %v264
    %v266 = vsel %vm251, %v265, 0.0
    %267 = vadd.xlane.f32.xlu0 %v266
    %v268 = vpop.xlane.xlu0 %267
    %v269 = vrcp.pop %v268
    %v270 = vmul.f32 1.0, %v269
    %v271 = vsel %vm251, %v270, 0.0
    %v272 = vsel %vm254, %v265, 0.0
    %273 = vadd.xlane.f32.xlu0 %v272
    %v274 = vpop.xlane.xlu0 %273
    %v275 = vrcp.pop %v274
    %v276 = vmul.f32 1.0, %v275
    %v277 = vsel %vm254, %v276, %v271
    %v278 = vmul.f32 %v265, %v277
    %279 = vst [vmem:[#allocation8] sm:$0xff] %v278
    // Predicated region
    $region34: #{tpu_custom_call.1} parent=1 // pred_check
      _
    $region35: #{tpu_custom_call.1} parent=1 // pred_check_branch
      %281 = sbr.rel (0) target = $region37
    $region36: #{tpu_custom_call.1} parent=1 // pred_region
      %s283 = ssub.s32 128, 128
      %284 = vsyncadd [#allocation4], %s283
      %s286 = sshll.u32 [#allocation8], 4
      %s287 = int_to_ptr.vmem [resolvable:$true] %s286
      %289 = dma.vmem_to_hbm [thread:$0]  %s287, 128, %s5, [#allocation4]
    $region37: #{tpu_custom_call.1} parent=1 // pred_fallthru
      _
    // Predicated region
    $region38: #{tpu_custom_call.1} parent=1 // pred_check
      _
    $region39: #{tpu_custom_call.1} parent=1 // pred_check_branch
      %291 = sbr.rel (0) target = $region41
    $region40: #{tpu_custom_call.1} parent=1 // pred_region
      %292 = dma.done [#allocation4], 128
    $region41: #{tpu_custom_call.1} parent=1 // pred_fallthru
      _
    %293 = vsyncpa [#allocation3], 1
    %294 = vsyncpa [#allocation6], 1
    %295 = vsyncpa [#allocation4], 1

// kernel: tpu_custom_call.1
$region0: #{tpu_custom_call.1}
  #allocation0 [shape = 'u32[]', space=smem, size = 0x4, offset = 0x4, fixed_abs, tag = 'smem constant byte address 0x4 - core index']
  #allocation1 [shape = 'u32[144,128]{1,0:T(1,128)}', space=vmem, size = 0x12000, scoped, tag = 'internal scratch']
  %s0 = inlined_call_operand.hbm [shape: f32[8,128], index: 0, kind: input, shape index: {}]
  %s1 = inlined_call_operand.hbm [shape: f32[128,128], index: 1, kind: input, shape index: {}]
  %s2 = inlined_call_operand.vmem [shape: f32[1,128], index: 2, kind: input, shape index: {}]
  %s3 = inlined_call_operand.hbm [shape: f32[128,128], index: 3, kind: input, shape index: {}]
  %s4 = inlined_call_operand.vmem [shape: f32[1,128], index: 4, kind: input, shape index: {}]
  %s5 = inlined_call_operand.hbm [shape: f32[8,128], index: 5, kind: output, shape index: {}]
  %s6 = sld [smem:[#allocation0]]
  $region42: #{tpu_custom_call.1} parent=0
    _
  %s8 = ssub.s32 1, %s6
  %s9 = scalar_select 0, %s8, %s6
  $region1: #{tpu_custom_call.1} parent=0
    #allocation2 [shape = 'u8[4096]{0}', space=vmem, size = 0x1000, scoped, tag = 'input window, operand 0, single buffered']
    #allocation3 [shape = 's32[1]{0}', space=sflag, size = 0x4, scoped, tag = 'scoped memory for tpu_custom_call.1']
    #allocation4 [shape = 's32[1]{0}', space=sflag, size = 0x4, scoped, tag = 'scoped memory for tpu_custom_call.1']
    #allocation5 [shape = 'u8[65536]{0}', space=vmem, size = 0x10000, scoped, tag = 'input window, operand 1, single buffered']
    #allocation6 [shape = 's32[1]{0}', space=sflag, size = 0x4, scoped, tag = 'scoped memory for tpu_custom_call.1']
    #allocation7 [shape = 'u8[65536]{0}', space=vmem, size = 0x10000, scoped, tag = 'input window, operand 3, single buffered']
    #allocation8 [shape = 'u8[4096]{0}', space=vmem, size = 0x1000, scoped, tag = 'output window, operand 0, single buffered']
    %10 = vsyncpa [#allocation3], 0
    %11 = vsyncpa [#allocation6], 0
    %12 = vsyncpa [#allocation4], 0
    // Predicated region
    $region2: #{tpu_custom_call.1} parent=1 // pred_check
      _
    $region3: #{tpu_custom_call.1} parent=1 // pred_check_branch
      %14 = sbr.rel (0) target = $region5
    $region4: #{tpu_custom_call.1} parent=1 // pred_region
      %s16 = ssub.s32 128, 128
      %17 = vsyncadd [#allocation3], %s16
      %s19 = sshll.u32 [#allocation2], 4
      %s20 = int_to_ptr.vmem [resolvable:$true] %s19
      %22 = dma.hbm_to_vmem [thread:$0]  %s0, 128, %s20, [#allocation3]
    $region5: #{tpu_custom_call.1} parent=1 // pred_fallthru
      _
    // Predicated region
    $region6: #{tpu_custom_call.1} parent=1 // pred_check
      _
    $region7: #{tpu_custom_call.1} parent=1 // pred_check_branch
      %24 = sbr.rel (0) target = $region9
    $region8: #{tpu_custom_call.1} parent=1 // pred_region
      %s26 = ssub.s32 2048, 2048
      %27 = vsyncadd [#allocation6], %s26
      %s28 = sshll.u32 [#allocation5], 4
      %s29 = int_to_ptr.vmem [resolvable:$true] %s28
      %34 = dma.hbm_to_vmem [thread:$0]  %s1, 2048, %s29, [#allocation6], 128, 128, 8
    $region9: #{tpu_custom_call.1} parent=1 // pred_fallthru
      _
    // Predicated region
    $region10: #{tpu_custom_call.1} parent=1 // pred_check
      _
    $region11: #{tpu_custom_call.1} parent=1 // pred_check_branch
      %36 = sbr.rel (0) target = $region13
    $region12: #{tpu_custom_call.1} parent=1 // pred_region
      _
    $region13: #{tpu_custom_call.1} parent=1 // pred_fallthru
      _
    // Predicated region
    $region14: #{tpu_custom_call.1} parent=1 // pred_check
      _
    $region15: #{tpu_custom_call.1} parent=1 // pred_check_branch
      %38 = sbr.rel (0) target = $region17
    $region16: #{tpu_custom_call.1} parent=1 // pred_region
      %s40 = ssub.s32 2048, 2048
      %41 = vsyncadd [#allocation6], %s40
      %s42 = sshll.u32 [#allocation7], 4
      %s43 = int_to_ptr.vmem [resolvable:$true] %s42
      %48 = dma.hbm_to_vmem [thread:$0]  %s3, 2048, %s43, [#allocation6], 128, 128, 8
    $region17: #{tpu_custom_call.1} parent=1 // pred_fallthru
      _
    // Predicated region
    $region18: #{tpu_custom_call.1} parent=1 // pred_check
      _
    $region19: #{tpu_custom_call.1} parent=1 // pred_check_branch
      %50 = sbr.rel (0) target = $region21
    $region20: #{tpu_custom_call.1} parent=1 // pred_region
      _
    $region21: #{tpu_custom_call.1} parent=1 // pred_fallthru
      _
    // Predicated region
    $region22: #{tpu_custom_call.1} parent=1 // pred_check
      _
    $region23: #{tpu_custom_call.1} parent=1 // pred_check_branch
      %52 = sbr.rel (0) target = $region25
    $region24: #{tpu_custom_call.1} parent=1 // pred_region
      %53 = dma.done [#allocation3], 128
    $region25: #{tpu_custom_call.1} parent=1 // pred_fallthru
      _
    // Predicated region
    $region26: #{tpu_custom_call.1} parent=1 // pred_check
      _
    $region27: #{tpu_custom_call.1} parent=1 // pred_check_branch
      %55 = sbr.rel (0) target = $region29
    $region28: #{tpu_custom_call.1} parent=1 // pred_region
      %56 = dma.done [#allocation6], 2048
    $region29: #{tpu_custom_call.1} parent=1 // pred_fallthru
      _
    // Predicated region
    $region30: #{tpu_custom_call.1} parent=1 // pred_check
      _
    $region31: #{tpu_custom_call.1} parent=1 // pred_check_branch
      %58 = sbr.rel (0) target = $region33
    $region32: #{tpu_custom_call.1} parent=1 // pred_region
      %59 = dma.done [#allocation6], 2048
    $region33: #{tpu_custom_call.1} parent=1 // pred_fallthru
      _
    %v60 = vld [vmem:[#allocation2] sm:$0xff]
    %v61 = vld [vmem:[#allocation5] sm:$0xff]
    %v62 = vld [vmem:[#allocation5 + $0x8] sm:$0xff]
    %v63 = vld [vmem:[#allocation5 + $0x10] sm:$0xff]
    %v64 = vld [vmem:[#allocation5 + $0x18] sm:$0xff]
    %v65 = vld [vmem:[#allocation5 + $0x20] sm:$0xff]
    %v66 = vld [vmem:[#allocation5 + $0x28] sm:$0xff]
    %v67 = vld [vmem:[#allocation5 + $0x30] sm:$0xff]
    %v68 = vld [vmem:[#allocation5 + $0x38] sm:$0xff]
    %v69 = vld [vmem:[#allocation5 + $0x40] sm:$0xff]
    %v70 = vld [vmem:[#allocation5 + $0x48] sm:$0xff]
    %v71 = vld [vmem:[#allocation5 + $0x50] sm:$0xff]
    %v72 = vld [vmem:[#allocation5 + $0x58] sm:$0xff]
    %v73 = vld [vmem:[#allocation5 + $0x60] sm:$0xff]
    %v74 = vld [vmem:[#allocation5 + $0x68] sm:$0xff]
    %v75 = vld [vmem:[#allocation5 + $0x70] sm:$0xff]
    %v76 = vld [vmem:[#allocation5 + $0x78] sm:$0xff]
    %v77 = vld [vmem:[%s2] sm:$0x1]
    %v79 = vlaneseq
    %v80 = vshrl.u32 %v79, 7
    %v81 = vsub.s32 0, %v80
    %v82 = vrot.slane %v77, %v81
    %84 = vmatprep.subr.mxu0 0.0
    %85 = vmatpush1.msra.mxu0 %v61
    %86 = vmatprep.subr.mxu0 0.0
    %87 = vmatpush1.msra.mxu0 %v62
    %88 = vmatprep.subr.mxu0 0.0
    %89 = vmatpush1.msra.mxu0 %v63
    %90 = vmatprep.subr.mxu0 0.0
    %91 = vmatpush1.msra.mxu0 %v64
    %92 = vmatprep.subr.mxu0 0.0
    %93 = vmatpush1.msra.mxu0 %v65
    %94 = vmatprep.subr.mxu0 0.0
    %95 = vmatpush1.msra.mxu0 %v66
    %96 = vmatprep.subr.mxu0 0.0
    %97 = vmatpush1.msra.mxu0 %v67
    %98 = vmatprep.subr.mxu0 0.0
    %99 = vmatpush1.msra.mxu0 %v68
    %100 = vmatprep.subr.mxu0 0.0
    %101 = vmatpush1.msra.mxu0 %v69
    %102 = vmatprep.subr.mxu0 0.0
    %103 = vmatpush1.msra.mxu0 %v70
    %104 = vmatprep.subr.mxu0 0.0
    %105 = vmatpush1.msra.mxu0 %v71
    %106 = vmatprep.subr.mxu0 0.0
    %107 = vmatpush1.msra.mxu0 %v72
    %108 = vmatprep.subr.mxu0 0.0
    %109 = vmatpush1.msra.mxu0 %v73
    %110 = vmatprep.subr.mxu0 0.0
    %111 = vmatpush1.msra.mxu0 %v74
    %112 = vmatprep.subr.mxu0 0.0
    %113 = vmatpush1.msra.mxu0 %v75
    %114 = vmatprep.subr.mxu0 0.0
    %115 = vmatpush1.msra.mxu0 %v76
    %116 = vmatprep.subr.mxu0 0.0
    %117 = vmatpush1.msra.mxu0 0.0
    %118 = vmatprep.subr.mxu0 0.0
    %119 = vmatpush1.msra.mxu0 0.0
    %120 = vmatprep.subr.mxu0 0.0
    %121 = vmatpush1.msra.mxu0 0.0
    %122 = vmatprep.subr.mxu0 0.0
    %123 = vmatpush1.msra.mxu0 0.0
    %124 = vmatprep.subr.mxu0 0.0
    %125 = vmatpush1.msra.mxu0 0.0
    %126 = vmatprep.subr.mxu0 0.0
    %127 = vmatpush1.msra.mxu0 0.0
    %128 = vmatprep.subr.mxu0 0.0
    %129 = vmatpush1.msra.mxu0 0.0
    %130 = vmatprep.subr.mxu0 0.0
    %131 = vmatpush1.msra.mxu0 0.0
    %132 = vmatprep.subr.mxu0 0.0
    %133 = vmatpush1.msra.mxu0 0.0
    %134 = vmatprep.subr.mxu0 0.0
    %135 = vmatpush1.msra.mxu0 0.0
    %136 = vmatprep.subr.mxu0 0.0
    %137 = vmatpush1.msra.mxu0 0.0
    %138 = vmatprep.subr.mxu0 0.0
    %139 = vmatpush1.msra.mxu0 0.0
    %140 = vmatprep.subr.mxu0 0.0
    %141 = vmatpush1.msra.mxu0 0.0
    %142 = vmatprep.subr.mxu0 0.0
    %143 = vmatpush1.msra.mxu0 0.0
    %144 = vmatprep.subr.mxu0 0.0
    %145 = vmatpush1.msra.mxu0 0.0
    %146 = vmatprep.subr.mxu0 0.0
    %147 = vmatpush1.msra.mxu0 0.0
    %148 = vmatprep.mubr.f32.mxu0 0.0
    %149 = vmatmul.mubr.f32.gmra.mrb[0].mxu0 %v60
    %v150 = vpop.f32.mrb[0].mxu0
    %v151 = vadd.f32 %v82, %v150
    %v152 = vpop.f32.mrb[0].mxu0
    %153 = vdwg.mxu0
    %v154 = vld [vmem:[#allocation7] sm:$0xff]
    %v155 = vld [vmem:[#allocation7 + $0x8] sm:$0xff]
    %v156 = vld [vmem:[#allocation7 + $0x10] sm:$0xff]
    %v157 = vld [vmem:[#allocation7 + $0x18] sm:$0xff]
    %v158 = vld [vmem:[#allocation7 + $0x20] sm:$0xff]
    %v159 = vld [vmem:[#allocation7 + $0x28] sm:$0xff]
    %v160 = vld [vmem:[#allocation7 + $0x30] sm:$0xff]
    %v161 = vld [vmem:[#allocation7 + $0x38] sm:$0xff]
    %v162 = vld [vmem:[#allocation7 + $0x40] sm:$0xff]
    %v163 = vld [vmem:[#allocation7 + $0x48] sm:$0xff]
    %v164 = vld [vmem:[#allocation7 + $0x50] sm:$0xff]
    %v165 = vld [vmem:[#allocation7 + $0x58] sm:$0xff]
    %v166 = vld [vmem:[#allocation7 + $0x60] sm:$0xff]
    %v167 = vld [vmem:[#allocation7 + $0x68] sm:$0xff]
    %v168 = vld [vmem:[#allocation7 + $0x70] sm:$0xff]
    %v169 = vld [vmem:[#allocation7 + $0x78] sm:$0xff]
    %v170 = vld [vmem:[%s4] sm:$0x1]
    %v172 = vlaneseq
    %v173 = vshrl.u32 %v172, 7
    %v174 = vsub.s32 0, %v173
    %v175 = vrot.slane %v170, %v174
    %177 = vmatprep.subr.mxu0 0.0
    %178 = vmatpush1.msra.mxu0 %v154
    %179 = vmatprep.subr.mxu0 0.0
    %180 = vmatpush1.msra.mxu0 %v155
    %181 = vmatprep.subr.mxu0 0.0
    %182 = vmatpush1.msra.mxu0 %v156
    %183 = vmatprep.subr.mxu0 0.0
    %184 = vmatpush1.msra.mxu0 %v157
    %185 = vmatprep.subr.mxu0 0.0
    %186 = vmatpush1.msra.mxu0 %v158
    %187 = vmatprep.subr.mxu0 0.0
    %188 = vmatpush1.msra.mxu0 %v159
    %189 = vmatprep.subr.mxu0 0.0
    %190 = vmatpush1.msra.mxu0 %v160
    %191 = vmatprep.subr.mxu0 0.0
    %192 = vmatpush1.msra.mxu0 %v161
    %193 = vmatprep.subr.mxu0 0.0
    %194 = vmatpush1.msra.mxu0 %v162
    %195 = vmatprep.subr.mxu0 0.0
    %196 = vmatpush1.msra.mxu0 %v163
    %197 = vmatprep.subr.mxu0 0.0
    %198 = vmatpush1.msra.mxu0 %v164
    %199 = vmatprep.subr.mxu0 0.0
    %200 = vmatpush1.msra.mxu0 %v165
    %201 = vmatprep.subr.mxu0 0.0
    %202 = vmatpush1.msra.mxu0 %v166
    %203 = vmatprep.subr.mxu0 0.0
    %204 = vmatpush1.msra.mxu0 %v167
    %205 = vmatprep.subr.mxu0 0.0
    %206 = vmatpush1.msra.mxu0 %v168
    %207 = vmatprep.subr.mxu0 0.0
    %208 = vmatpush1.msra.mxu0 %v169
    %209 = vmatprep.subr.mxu0 0.0
    %210 = vmatpush1.msra.mxu0 0.0
    %211 = vmatprep.subr.mxu0 0.0
    %212 = vmatpush1.msra.mxu0 0.0
    %213 = vmatprep.subr.mxu0 0.0
    %214 = vmatpush1.msra.mxu0 0.0
    %215 = vmatprep.subr.mxu0 0.0
    %216 = vmatpush1.msra.mxu0 0.0
    %217 = vmatprep.subr.mxu0 0.0
    %218 = vmatpush1.msra.mxu0 0.0
    %219 = vmatprep.subr.mxu0 0.0
    %220 = vmatpush1.msra.mxu0 0.0
    %221 = vmatprep.subr.mxu0 0.0
    %222 = vmatpush1.msra.mxu0 0.0
    %223 = vmatprep.subr.mxu0 0.0
    %224 = vmatpush1.msra.mxu0 0.0
    %225 = vmatprep.subr.mxu0 0.0
    %226 = vmatpush1.msra.mxu0 0.0
    %227 = vmatprep.subr.mxu0 0.0
    %228 = vmatpush1.msra.mxu0 0.0
    %229 = vmatprep.subr.mxu0 0.0
    %230 = vmatpush1.msra.mxu0 0.0
    %231 = vmatprep.subr.mxu0 0.0
    %232 = vmatpush1.msra.mxu0 0.0
    %233 = vmatprep.subr.mxu0 0.0
    %234 = vmatpush1.msra.mxu0 0.0
    %235 = vmatprep.subr.mxu0 0.0
    %236 = vmatpush1.msra.mxu0 0.0
    %237 = vmatprep.subr.mxu0 0.0
    %238 = vmatpush1.msra.mxu0 0.0
    %239 = vmatprep.subr.mxu0 0.0
    %240 = vmatpush1.msra.mxu0 0.0
    %241 = vmatprep.mubr.f32.mxu0 0.0
    %242 = vmatmul.mubr.f32.gmra.mrb[0].mxu0 %v151
    %v243 = vpop.f32.mrb[0].mxu0
    %v244 = vadd.f32 %v175, %v243
    %v245 = vpop.f32.mrb[0].mxu0
    %246 = vdwg.mxu0
    %v247 = vlaneseq
    %v248 = vand.u32 %v247, 127
    %vm249 = vcmp.ge.s32.totalorder %v248, 0
    %vm250 = vcmp.lt.s32.totalorder %v248, 16
    %vm251 = vmand %vm249, %vm250
    %vm252 = vcmp.ge.s32.totalorder %v248, 16
    %vm253 = vcmp.lt.s32.totalorder %v248, 48
    %vm254 = vmand %vm252, %vm253
    %v255 = vsel %vm251, %v244, -1e+30
    %256 = vmax.xlane.f32.xlu0 %v255
    %v257 = vpop.xlane.xlu0 %256
    %v258 = vsel %vm251, %v257, 0.0
    %v259 = vsel %vm254, %v244, -1e+30
    %260 = vmax.xlane.f32.xlu0 %v259
    %v261 = vpop.xlane.xlu0 %260
    %v262 = vsel %vm254, %v261, %v258
    %v263 = vsub.f32 %v244, %v262
    %v264 = vmul.f32 %v263, 1.442695
    %v265 = vpow.pop %v264
    %v266 = vsel %vm251, %v265, 0.0
    %267 = vadd.xlane.f32.xlu0 %v266
    %v268 = vpop.xlane.xlu0 %267
    %v269 = vrcp.pop %v268
    %v270 = vmul.f32 1.0, %v269
    %v271 = vsel %vm251, %v270, 0.0
    %v272 = vsel %vm254, %v265, 0.0
    %273 = vadd.xlane.f32.xlu0 %v272
    %v274 = vpop.xlane.xlu0 %273
    %v275 = vrcp.pop %v274
    %v276 = vmul.f32 1.0, %v275
    %v277 = vsel %vm254, %v276, %v271
    %v278 = vmul.f32 %v265, %v277
    %279 = vst [vmem:[#allocation8] sm:$0xff] %v278
    // Predicated region
    $region34: #{tpu_custom_call.1} parent=1 // pred_check
      _
    $region35: #{tpu_custom_call.1} parent=1 // pred_check_branch
      %281 = sbr.rel (0) target = $region37
    $region36: #{tpu_custom_call.1} parent=1 // pred_region
      %s283 = ssub.s32 128, 128
      %284 = vsyncadd [#allocation4], %s283
      %s286 = sshll.u32 [#allocation8], 4
      %s287 = int_to_ptr.vmem [resolvable:$true] %s286
      %289 = dma.vmem_to_hbm [thread:$0]  %s287, 128, %s5, [#allocation4]
    $region37: #{tpu_custom_call.1} parent=1 // pred_fallthru
      _
    // Predicated region
    $region38: #{tpu_custom_call.1} parent=1 // pred_check
      _
    $region39: #{tpu_custom_call.1} parent=1 // pred_check_branch
      %291 = sbr.rel (0) target = $region41
    $region40: #{tpu_custom_call.1} parent=1 // pred_region
      %292 = dma.done [#allocation4], 128
    $region41: #{tpu_custom_call.1} parent=1 // pred_fallthru
      _
    %293 = vsyncpa [#allocation3], 1
    %294 = vsyncpa [#allocation6], 1
    %295 = vsyncpa [#allocation4], 1

</llo_original>
